<compile_context>
chip_gen: v7x
topology: tpu7x:2x2x1
jax: 0.10.0
libtpu: 0.0.40
codegen_flags: <defaults>
</compile_context>

<pallas_src>
import numpy as np
import jax
import jax.numpy as jnp
from jax.experimental import pallas as pl
from jax.experimental.pallas import tpu as pltpu

_MAX_DMA_CHUNKS = 4  # number of concurrent HBM->HBM DMA streams


def _make_flatten_dma_kernel(row_chunks):
    """Build a kernel copying static (start, size) row chunks of a (B, F) slab."""

    def kernel(x_ref, o_ref, sems):
        # x_ref / o_ref are raw HBM refs (memory_space=pl.ANY).
        copies = []
        for idx, (start, size) in enumerate(row_chunks):
            cp = pltpu.make_async_copy(
                x_ref.at[pl.ds(start, size), :],
                o_ref.at[pl.ds(start, size), :],
                sems.at[idx],
            )
            cp.start()
            copies.append(cp)
        # Wait only after all DMAs are in flight so they overlap.
        for cp in copies:
            cp.wait()

    return kernel


def _hbm_to_hbm_copy_2d(x2d):
    """Materializing (B, F) copy done entirely with HBM->HBM DMA (no VMEM staging)."""
    rows, cols = x2d.shape

    if rows == 0 or cols == 0:
        # Nothing to copy; empty result with the right shape/dtype.
        return jnp.empty((rows, cols), x2d.dtype)

    # Static row chunking: up to _MAX_DMA_CHUNKS concurrent DMA streams.
    n_chunks = max(1, min(_MAX_DMA_CHUNKS, rows))
    base, rem = divmod(rows, n_chunks)
    chunks, start = [], 0
    for i in range(n_chunks):
        size = base + (1 if i < rem else 0)
        chunks.append((start, size))
        start += size

    return pl.pallas_call(
        _make_flatten_dma_kernel(tuple(chunks)),
        out_shape=jax.ShapeDtypeStruct((rows, cols), x2d.dtype),
        in_specs=[pl.BlockSpec(memory_space=pl.ANY)],   # raw HBM ref, no auto-DMA
        out_specs=pl.BlockSpec(memory_space=pl.ANY),    # raw HBM ref, no auto-DMA
        scratch_shapes=[pltpu.SemaphoreType.DMA((n_chunks,))],
    )(x2d)


@jax.jit
def view_flatten(x):
    """Pallas ViewFlatten.forward: (B, ...) -> (B, prod(rest)), contiguous order."""
    B = x.shape[0]
    F = int(np.prod(x.shape[1:])) if x.ndim > 1 else 1
    # Pure metadata reshape of the contiguous buffer; the Pallas kernel then
    # materializes the (B, F) result with a roofline HBM->HBM DMA copy.
    x2d = jnp.reshape(x, (B, F))
    return _hbm_to_hbm_copy_2d(x2d)


if __name__ == "__main__":
    key = jax.random.PRNGKey(0)
    # Small NCHW input consistent with the module's usage: B=2, C=4, H=W=16.
    x = jax.random.normal(key, (2, 4, 16, 16), dtype=jnp.float32)

    y = view_flatten(x)
    y = jax.block_until_ready(y)

    # Reference: torch's x.view(B, -1) == contiguous reshape.
    ref = jnp.reshape(x, (x.shape[0], -1))
    assert y.shape == (2, 4 * 16 * 16), y.shape
    assert y.dtype == x.dtype
    assert jnp.array_equal(y, ref), "mismatch vs reference flatten"

    print("KERNEL_OK")
</pallas_src>

<mosaic_0001>
module attributes {stable_mosaic.version = 11 : i64} {
  func.func @kernel(%arg0: memref<2x1024xf32, #tpu.memory_space<any>>, %arg1: memref<2x1024xf32, #tpu.memory_space<any>>, %arg2: memref<2x!tpu.dma_semaphore, #tpu.memory_space<semaphore_mem>>) attributes {dimension_semantics = [], scalar_prefetch = 0 : i64, scratch_operands = 1 : i64, tpu.core_type = #tpu.core_type<tc>} {
    %c0_i32 = arith.constant 0 : i32
    %c0_i32_0 = arith.constant 0 : i32
    %c0_i32_1 = arith.constant 0 : i32
    %0 = tpu.memref_slice %arg0[%c0_i32_0, %c0_i32_1] : memref<2x1024xf32, #tpu.memory_space<any>> -> memref<1x1024xf32, #tpu.memory_space<any>>
    %c0_i32_2 = arith.constant 0 : i32
    %c0_i32_3 = arith.constant 0 : i32
    %1 = tpu.memref_slice %arg1[%c0_i32_2, %c0_i32_3] : memref<2x1024xf32, #tpu.memory_space<any>> -> memref<1x1024xf32, #tpu.memory_space<any>>
    %2 = tpu.memref_slice %arg2[%c0_i32] : memref<2x!tpu.dma_semaphore, #tpu.memory_space<semaphore_mem>> -> memref<1x!tpu.dma_semaphore, #tpu.memory_space<semaphore_mem>>
    %3 = tpu.memref_squeeze %2 : memref<1x!tpu.dma_semaphore, #tpu.memory_space<semaphore_mem>> -> memref<!tpu.dma_semaphore, #tpu.memory_space<semaphore_mem>>
    tpu.enqueue_dma source(%0 : memref<1x1024xf32, #tpu.memory_space<any>>) target(%1 : memref<1x1024xf32, #tpu.memory_space<any>>) target_semaphore(%3 : memref<!tpu.dma_semaphore, #tpu.memory_space<semaphore_mem>>)
    %c1_i32 = arith.constant 1 : i32
    %c1_i32_4 = arith.constant 1 : i32
    %c0_i32_5 = arith.constant 0 : i32
    %4 = tpu.memref_slice %arg0[%c1_i32_4, %c0_i32_5] : memref<2x1024xf32, #tpu.memory_space<any>> -> memref<1x1024xf32, #tpu.memory_space<any>>
    %c1_i32_6 = arith.constant 1 : i32
    %c0_i32_7 = arith.constant 0 : i32
    %5 = tpu.memref_slice %arg1[%c1_i32_6, %c0_i32_7] : memref<2x1024xf32, #tpu.memory_space<any>> -> memref<1x1024xf32, #tpu.memory_space<any>>
    %6 = tpu.memref_slice %arg2[%c1_i32] : memref<2x!tpu.dma_semaphore, #tpu.memory_space<semaphore_mem>> -> memref<1x!tpu.dma_semaphore, #tpu.memory_space<semaphore_mem>>
    %7 = tpu.memref_squeeze %6 : memref<1x!tpu.dma_semaphore, #tpu.memory_space<semaphore_mem>> -> memref<!tpu.dma_semaphore, #tpu.memory_space<semaphore_mem>>
    tpu.enqueue_dma source(%4 : memref<1x1024xf32, #tpu.memory_space<any>>) target(%5 : memref<1x1024xf32, #tpu.memory_space<any>>) target_semaphore(%7 : memref<!tpu.dma_semaphore, #tpu.memory_space<semaphore_mem>>)
    %c0_i32_8 = arith.constant 0 : i32
    %c0_i32_9 = arith.constant 0 : i32
    %c0_i32_10 = arith.constant 0 : i32
    %8 = tpu.memref_slice %arg0[%c0_i32_9, %c0_i32_10] : memref<2x1024xf32, #tpu.memory_space<any>> -> memref<1x1024xf32, #tpu.memory_space<any>>
    %c0_i32_11 = arith.constant 0 : i32
    %c0_i32_12 = arith.constant 0 : i32
    %9 = tpu.memref_slice %arg1[%c0_i32_11, %c0_i32_12] : memref<2x1024xf32, #tpu.memory_space<any>> -> memref<1x1024xf32, #tpu.memory_space<any>>
    %10 = tpu.memref_slice %arg2[%c0_i32_8] : memref<2x!tpu.dma_semaphore, #tpu.memory_space<semaphore_mem>> -> memref<1x!tpu.dma_semaphore, #tpu.memory_space<semaphore_mem>>
    %11 = tpu.memref_squeeze %10 : memref<1x!tpu.dma_semaphore, #tpu.memory_space<semaphore_mem>> -> memref<!tpu.dma_semaphore, #tpu.memory_space<semaphore_mem>>
    tpu.wait_dma2 semaphore(%11 : memref<!tpu.dma_semaphore, #tpu.memory_space<semaphore_mem>>) src(%8 : memref<1x1024xf32, #tpu.memory_space<any>>) dst(%9 : memref<1x1024xf32, #tpu.memory_space<any>>)
    %c1_i32_13 = arith.constant 1 : i32
    %c1_i32_14 = arith.constant 1 : i32
    %c0_i32_15 = arith.constant 0 : i32
    %12 = tpu.memref_slice %arg0[%c1_i32_14, %c0_i32_15] : memref<2x1024xf32, #tpu.memory_space<any>> -> memref<1x1024xf32, #tpu.memory_space<any>>
    %c1_i32_16 = arith.constant 1 : i32
    %c0_i32_17 = arith.constant 0 : i32
    %13 = tpu.memref_slice %arg1[%c1_i32_16, %c0_i32_17] : memref<2x1024xf32, #tpu.memory_space<any>> -> memref<1x1024xf32, #tpu.memory_space<any>>
    %14 = tpu.memref_slice %arg2[%c1_i32_13] : memref<2x!tpu.dma_semaphore, #tpu.memory_space<semaphore_mem>> -> memref<1x!tpu.dma_semaphore, #tpu.memory_space<semaphore_mem>>
    %15 = tpu.memref_squeeze %14 : memref<1x!tpu.dma_semaphore, #tpu.memory_space<semaphore_mem>> -> memref<!tpu.dma_semaphore, #tpu.memory_space<semaphore_mem>>
    tpu.wait_dma2 semaphore(%15 : memref<!tpu.dma_semaphore, #tpu.memory_space<semaphore_mem>>) src(%12 : memref<1x1024xf32, #tpu.memory_space<any>>) dst(%13 : memref<1x1024xf32, #tpu.memory_space<any>>)
    return
  }
}

</mosaic_0001>

<llo_original>
// kernel: view_flatten.1
$region0: #{view_flatten.1}
  #allocation0 [shape = 'u32[]', space=smem, size = 0x4, offset = 0x4, fixed_abs, tag = 'smem constant byte address 0x4 - core index']
  #allocation1 [shape = 'u32[144,128]{1,0:T(1,128)}', space=vmem, size = 0x12000, scoped, tag = 'internal scratch']
  #allocation2 [shape = 's32[2]{0}', space=sflag, size = 0x8, scoped, tag = 'scratch operand']
  #allocation3 [shape = 's32[]', space=sflag, size = 0x4, offset = 0, fixed_abs, tag = 'sflag constant byte address 0x0 - dummy sync flag']
  #allocation4 [shape = 's32[]', space=sflag, size = 0x4, offset = 0, fixed_abs, tag = 'sflag constant byte address 0x0 - dummy sync flag']
  %s0 = inlined_call_operand.vmem [shape: f32[2,1024], index: 0, kind: input, shape index: {}]
  %s1 = inlined_call_operand.hbm [shape: f32[2,1024], index: 1, kind: output, shape index: {}]
  %s2 = sld [smem:[#allocation0]]
  $region2: #{view_flatten.1} parent=0
    _
  %s4 = ssub.s32 1, %s2
  %s5 = scalar_select 0, %s4, %s2
  %s7 = sshll.u32 %s0, 4
  %s8 = int_to_ptr.vmem [resolvable:$true] %s7
  %10 = dma.vmem_to_hbm [thread:$0]  %s8, 128, %s1, [#allocation2], 32, 32, 1
  %s11 = scalar_lea.vmem %s0, 1
  %s12 = scalar_lea.hbm %s1, 16
  %s13 = scalar_lea.sflag [#allocation2], 1
  %s15 = sshll.u32 %s11, 4
  %s16 = int_to_ptr.vmem [resolvable:$true] %s15
  %18 = dma.vmem_to_hbm [thread:$0]  %s16, 128, %s12, %s13, 32, 32, 1
  %s19 = smul.u32 1, 8
  %s20 = sshll.u32 %s19, 4
  %21 = dma.done [#allocation2], %s20
  %s22 = sshll.u32 %s19, 4
  %23 = dma.done %s13, %s22
  %24 = vsyncmov [#allocation2]
  %s25 = vpop.sfrf %24
  %p26 = scmp.eq.s32.totalorder %s25, 0
  %p27 = pneg %p26
  %29 = shalt.err (%p27)
  %s30 = scalar_lea.sflag [#allocation2], 1
  %31 = vsyncmov %s30
  %s32 = vpop.sfrf %31
  %p33 = scmp.eq.s32.totalorder %s32, 0
  %p34 = pneg %p33
  %36 = shalt.err (%p34)

</llo_original>
